<compile_context>
chip_gen: v7x
topology: tpu7x:2x2x1
jax: 0.10.0
libtpu: 0.0.40
codegen_flags: <defaults>
</compile_context>

<pallas_src>
import jax
import jax.numpy as jnp
import numpy as np
from jax.experimental import pallas as pl
from jax.experimental.pallas import tpu as pltpu


# ----------------------------------------------------------------------------
# GELU (tanh approximation) — pure elementwise, lowers to VPU/EUP ops.
# ----------------------------------------------------------------------------
def _gelu_tanh(x):
    c = jnp.float32(0.7978845608028654)  # sqrt(2/pi)
    return 0.5 * x * (1.0 + jnp.tanh(c * (x + 0.044715 * x * x * x)))


# ----------------------------------------------------------------------------
# Pallas kernel: one (TM, dim) row-slab per grid step, fully fused FFN.
# ----------------------------------------------------------------------------
def _ffn_kernel(x_ref, w1_ref, b1_ref, w2_ref, b2_ref, o_ref):
    # x_ref:  (TM, dim)
    # w1_ref: (dim, hidden)   b1_ref: (1, hidden)
    # w2_ref: (hidden, dim)   b2_ref: (1, dim)
    # o_ref:  (TM, dim)
    x = x_ref[...]

    h = jnp.dot(x, w1_ref[...], preferred_element_type=jnp.float32)
    h = h + b1_ref[...]                       # broadcast bias once per slab
    h = _gelu_tanh(h)

    out = jnp.dot(h, w2_ref[...], preferred_element_type=jnp.float32)
    out = out + b2_ref[...]
    o_ref[...] = out.astype(o_ref.dtype)


# ----------------------------------------------------------------------------
# Row-block picker: biggest sublane-aligned TM that keeps the resident weights
# plus double-buffered activation slabs under a conservative VMEM budget.
# ----------------------------------------------------------------------------
def _pick_block_rows(m, dim, hidden, *, max_rows=512,
                     budget_bytes=12 * 1024 * 1024, elem_bytes=4):
    # Weights + biases (count as double-buffered to be safe).
    weight_bytes = 2 * (dim * hidden + hidden * dim + hidden + dim) * elem_bytes
    tm = min(max_rows, max(8, ((m + 7) // 8) * 8))
    tm = max(8, (tm // 8) * 8)
    while tm > 8:
        # x + out slabs double-buffered, plus the f32 hidden intermediate.
        act_bytes = (2 * 2 * tm * dim + tm * hidden) * elem_bytes
        if weight_bytes + act_bytes <= budget_bytes:
            break
        tm = max(8, (tm // 2 // 8) * 8)
    return tm


# ----------------------------------------------------------------------------
# Wrapper: flatten leading dims to rows, pad to the row-block size, call kernel.
# ----------------------------------------------------------------------------
def feedforward_pallas(x, w1, b1, w2, b2, *, block_rows=None):
    """y = GELU(x @ w1 + b1) @ w2 + b2, applied over the last axis of x."""
    orig_shape = x.shape
    dim = orig_shape[-1]
    hidden = w1.shape[1]
    assert w1.shape == (dim, hidden)
    assert w2.shape == (hidden, dim)

    x2 = x.reshape(-1, dim)
    m = x2.shape[0]

    tm = block_rows if block_rows is not None else _pick_block_rows(m, dim, hidden)
    tm = max(8, (min(tm, max(m, 8)) // 8) * 8)
    m_pad = ((m + tm - 1) // tm) * tm
    if m_pad != m:
        x2 = jnp.pad(x2, ((0, m_pad - m), (0, 0)))

    b1_2 = b1.reshape(1, hidden)
    b2_2 = b2.reshape(1, dim)

    out = pl.pallas_call(
        _ffn_kernel,
        out_shape=jax.ShapeDtypeStruct((m_pad, dim), x.dtype),
        grid=(m_pad // tm,),
        in_specs=[
            pl.BlockSpec((tm, dim), lambda i: (i, 0)),        # activations: tiled rows
            pl.BlockSpec((dim, hidden), lambda i: (0, 0)),    # w1: resident
            pl.BlockSpec((1, hidden), lambda i: (0, 0)),      # b1: resident
            pl.BlockSpec((hidden, dim), lambda i: (0, 0)),    # w2: resident
            pl.BlockSpec((1, dim), lambda i: (0, 0)),         # b2: resident
        ],
        out_specs=pl.BlockSpec((tm, dim), lambda i: (i, 0)),
        compiler_params=pltpu.CompilerParams(
            dimension_semantics=("parallel",)),
    )(x2, w1, b1_2, w2, b2_2)

    if m_pad != m:
        out = out[:m]
    return out.reshape(orig_shape)


# ----------------------------------------------------------------------------
# Pure-JAX reference (same tanh-GELU) for the correctness check.
# ----------------------------------------------------------------------------
def feedforward_reference(x, w1, b1, w2, b2):
    h = x @ w1 + b1
    h = _gelu_tanh(h)
    return h @ w2 + b2


# ----------------------------------------------------------------------------
if __name__ == "__main__":
    # Small config consistent with the module (trrnet uses channels-last maps).
    dim = 16
    hidden_dim = 32
    B, H, W = 2, 8, 8

    key = jax.random.PRNGKey(0)
    kx, k1, kb1, k2, kb2 = jax.random.split(key, 5)

    x = jax.random.normal(kx, (B, H, W, dim), dtype=jnp.float32)

    # Linear weights stored as (in, out) so y = x @ W + b
    # (equivalent to PyTorch's x @ W_torch.T + b).
    w1 = jax.random.normal(k1, (dim, hidden_dim), jnp.float32) * 0.1
    b1 = jax.random.normal(kb1, (hidden_dim,), jnp.float32) * 0.1
    w2 = jax.random.normal(k2, (hidden_dim, dim), jnp.float32) * 0.1
    b2 = jax.random.normal(kb2, (dim,), jnp.float32) * 0.1

    out = feedforward_pallas(x, w1, b1, w2, b2)
    out = jax.block_until_ready(out)

    ref = feedforward_reference(x, w1, b1, w2, b2)
    ref = jax.block_until_ready(ref)

    assert out.shape == (B, H, W, dim)
    np.testing.assert_allclose(np.asarray(out), np.asarray(ref),
                               rtol=1e-4, atol=1e-4)
    print("KERNEL_OK")
</pallas_src>

<mosaic_0001>
module attributes {stable_mosaic.version = 11 : i64} {
  func.func @_ffn_kernel(%arg0: i32, %arg1: memref<128x16xf32, #tpu.memory_space<vmem>>, %arg2: memref<16x32xf32, #tpu.memory_space<vmem>>, %arg3: memref<1x32xf32, #tpu.memory_space<vmem>>, %arg4: memref<32x16xf32, #tpu.memory_space<vmem>>, %arg5: memref<1x16xf32, #tpu.memory_space<vmem>>, %arg6: memref<128x16xf32, #tpu.memory_space<vmem>>) attributes {dimension_semantics = [#tpu.dimension_semantics<parallel>], iteration_bounds = array<i64: 1>, scalar_prefetch = 0 : i64, scratch_operands = 0 : i64, tpu.core_type = #tpu.core_type<tc>, window_params = [{transform_indices = @transform_0, window_bounds = array<i64: 128, 16>}, {pipeline_mode = #tpu.pipeline_mode<synchronous>, transform_indices = @transform_1, window_bounds = array<i64: 16, 32>}, {pipeline_mode = #tpu.pipeline_mode<synchronous>, transform_indices = @transform_2, window_bounds = array<i64: 1, 32>}, {pipeline_mode = #tpu.pipeline_mode<synchronous>, transform_indices = @transform_3, window_bounds = array<i64: 32, 16>}, {pipeline_mode = #tpu.pipeline_mode<synchronous>, transform_indices = @transform_4, window_bounds = array<i64: 1, 16>}, {transform_indices = @transform_5, window_bounds = array<i64: 128, 16>}]} {
    %c0 = arith.constant 0 : index
    %c0_0 = arith.constant 0 : index
    %0 = vector.load %arg1[%c0, %c0_0] : memref<128x16xf32, #tpu.memory_space<vmem>>, vector<128x16xf32>
    %c0_1 = arith.constant 0 : index
    %c0_2 = arith.constant 0 : index
    %1 = vector.load %arg2[%c0_1, %c0_2] : memref<16x32xf32, #tpu.memory_space<vmem>>, vector<16x32xf32>
    %cst = arith.constant dense<0.000000e+00> : vector<128x32xf32>
    %2 = tpu.matmul %0, %1, %cst {dimension_numbers = #tpu.dot_dimension_numbers<[1], [0], [0], [1], [0, 0, 1, 1], [], []>} : vector<128x16xf32>, vector<16x32xf32>, vector<128x32xf32> -> vector<128x32xf32>
    %c0_3 = arith.constant 0 : index
    %c0_4 = arith.constant 0 : index
    %3 = vector.load %arg3[%c0_3, %c0_4] : memref<1x32xf32, #tpu.memory_space<vmem>>, vector<1x32xf32>
    %4 = vector.broadcast %3 : vector<1x32xf32> to vector<128x32xf32>
    %5 = arith.addf %2, %4 : vector<128x32xf32>
    %cst_5 = arith.constant 5.000000e-01 : f32
    %6 = vector.broadcast %cst_5 : f32 to vector<128x32xf32>
    %7 = arith.mulf %6, %5 : vector<128x32xf32>
    %cst_6 = arith.constant 4.471500e-02 : f32
    %8 = vector.broadcast %cst_6 : f32 to vector<128x32xf32>
    %9 = arith.mulf %8, %5 : vector<128x32xf32>
    %10 = arith.mulf %9, %5 : vector<128x32xf32>
    %11 = arith.mulf %10, %5 : vector<128x32xf32>
    %12 = arith.addf %5, %11 : vector<128x32xf32>
    %cst_7 = arith.constant 0.797884583 : f32
    %13 = vector.broadcast %cst_7 : f32 to vector<128x32xf32>
    %14 = arith.mulf %13, %12 : vector<128x32xf32>
    %15 = math.tanh %14 : vector<128x32xf32>
    %cst_8 = arith.constant 1.000000e+00 : f32
    %16 = vector.broadcast %cst_8 : f32 to vector<128x32xf32>
    %17 = arith.addf %16, %15 : vector<128x32xf32>
    %18 = arith.mulf %7, %17 : vector<128x32xf32>
    %c0_9 = arith.constant 0 : index
    %c0_10 = arith.constant 0 : index
    %19 = vector.load %arg4[%c0_9, %c0_10] : memref<32x16xf32, #tpu.memory_space<vmem>>, vector<32x16xf32>
    %cst_11 = arith.constant dense<0.000000e+00> : vector<128x16xf32>
    %20 = tpu.matmul %18, %19, %cst_11 {dimension_numbers = #tpu.dot_dimension_numbers<[1], [0], [0], [1], [0, 0, 1, 1], [], []>} : vector<128x32xf32>, vector<32x16xf32>, vector<128x16xf32> -> vector<128x16xf32>
    %c0_12 = arith.constant 0 : index
    %c0_13 = arith.constant 0 : index
    %21 = vector.load %arg5[%c0_12, %c0_13] : memref<1x16xf32, #tpu.memory_space<vmem>>, vector<1x16xf32>
    %22 = vector.broadcast %21 : vector<1x16xf32> to vector<128x16xf32>
    %23 = arith.addf %20, %22 : vector<128x16xf32>
    %c0_14 = arith.constant 0 : index
    %c0_15 = arith.constant 0 : index
    %24 = vector.load %arg6[%c0_14, %c0_15] : memref<128x16xf32, #tpu.memory_space<vmem>>, vector<128x16xf32>
    tpu.vector_store %arg6[%c0_14, %c0_15], %23 {strides = array<i32>} : memref<128x16xf32, #tpu.memory_space<vmem>>, vector<128x16xf32>,
    return
  }
  func.func @transform_0(%arg0: i32) -> (i32, i32) {
    %c0_i32 = arith.constant 0 : i32
    %c0_i32_0 = arith.constant 0 : i32
    return %arg0, %c0_i32 : i32, i32
  }
  func.func @transform_1(%arg0: i32) -> (i32, i32) {
    %c0_i32 = arith.constant 0 : i32
    %c0_i32_0 = arith.constant 0 : i32
    %c0_i32_1 = arith.constant 0 : i32
    return %c0_i32, %c0_i32_0 : i32, i32
  }
  func.func @transform_2(%arg0: i32) -> (i32, i32) {
    %c0_i32 = arith.constant 0 : i32
    %c0_i32_0 = arith.constant 0 : i32
    %c0_i32_1 = arith.constant 0 : i32
    return %c0_i32, %c0_i32_0 : i32, i32
  }
  func.func @transform_3(%arg0: i32) -> (i32, i32) {
    %c0_i32 = arith.constant 0 : i32
    %c0_i32_0 = arith.constant 0 : i32
    %c0_i32_1 = arith.constant 0 : i32
    return %c0_i32, %c0_i32_0 : i32, i32
  }
  func.func @transform_4(%arg0: i32) -> (i32, i32) {
    %c0_i32 = arith.constant 0 : i32
    %c0_i32_0 = arith.constant 0 : i32
    %c0_i32_1 = arith.constant 0 : i32
    return %c0_i32, %c0_i32_0 : i32, i32
  }
  func.func @transform_5(%arg0: i32) -> (i32, i32) {
    %c0_i32 = arith.constant 0 : i32
    %c0_i32_0 = arith.constant 0 : i32
    return %arg0, %c0_i32 : i32, i32
  }
}

</mosaic_0001>

<llo_original>
// kernel: tpu_custom_call.1
$region0: #{tpu_custom_call.1}
  #allocation0 [shape = 'u32[]', space=smem, size = 0x4, offset = 0x4, fixed_abs, tag = 'smem constant byte address 0x4 - core index']
  #allocation1 [shape = 'u32[144,128]{1,0:T(1,128)}', space=vmem, size = 0x12000, scoped, tag = 'internal scratch']
  %s0 = inlined_call_operand.vmem [shape: f32[128,16], index: 0, kind: input, shape index: {}]
  %s1 = inlined_call_operand.vmem [shape: f32[16,32], index: 1, kind: input, shape index: {}]
  %s2 = inlined_call_operand.vmem [shape: f32[1,32], index: 2, kind: input, shape index: {}]
  %s3 = inlined_call_operand.vmem [shape: f32[32,16], index: 3, kind: input, shape index: {}]
  %s4 = inlined_call_operand.vmem [shape: f32[1,16], index: 4, kind: input, shape index: {}]
  %s5 = inlined_call_operand.vmem [shape: f32[128,16], index: 5, kind: output, shape index: {}]
  %s6 = sld [smem:[#allocation0]]
  $region30: #{tpu_custom_call.1} parent=0
    _
  %s8 = ssub.s32 1, %s6
  %s9 = scalar_select 0, %s8, %s6
  // Predicated region
  $region2: #{tpu_custom_call.1} parent=0 // pred_check
    _
  $region3: #{tpu_custom_call.1} parent=0 // pred_check_branch
    %11 = sbr.rel (0) target = $region5
  $region4: #{tpu_custom_call.1} parent=0 // pred_region
    _
  $region5: #{tpu_custom_call.1} parent=0 // pred_fallthru
    _
  // Predicated region
  $region6: #{tpu_custom_call.1} parent=0 // pred_check
    _
  $region7: #{tpu_custom_call.1} parent=0 // pred_check_branch
    %13 = sbr.rel (0) target = $region9
  $region8: #{tpu_custom_call.1} parent=0 // pred_region
    _
  $region9: #{tpu_custom_call.1} parent=0 // pred_fallthru
    _
  // Predicated region
  $region10: #{tpu_custom_call.1} parent=0 // pred_check
    _
  $region11: #{tpu_custom_call.1} parent=0 // pred_check_branch
    %15 = sbr.rel (0) target = $region13
  $region12: #{tpu_custom_call.1} parent=0 // pred_region
    _
  $region13: #{tpu_custom_call.1} parent=0 // pred_fallthru
    _
  // Predicated region
  $region14: #{tpu_custom_call.1} parent=0 // pred_check
    _
  $region15: #{tpu_custom_call.1} parent=0 // pred_check_branch
    %17 = sbr.rel (0) target = $region17
  $region16: #{tpu_custom_call.1} parent=0 // pred_region
    _
  $region17: #{tpu_custom_call.1} parent=0 // pred_fallthru
    _
  // Predicated region
  $region18: #{tpu_custom_call.1} parent=0 // pred_check
    _
  $region19: #{tpu_custom_call.1} parent=0 // pred_check_branch
    %19 = sbr.rel (0) target = $region21
  $region20: #{tpu_custom_call.1} parent=0 // pred_region
    _
  $region21: #{tpu_custom_call.1} parent=0 // pred_fallthru
    _
  %v20 = vld [vmem:[%s0] sm:$0xff]
  %v21 = vld [vmem:[%s0 + $0x8] sm:$0xff]
  %v22 = vld [vmem:[%s0 + $0x10] sm:$0xff]
  %v23 = vld [vmem:[%s0 + $0x18] sm:$0xff]
  %v24 = vld [vmem:[%s0 + $0x20] sm:$0xff]
  %v25 = vld [vmem:[%s0 + $0x28] sm:$0xff]
  %v26 = vld [vmem:[%s0 + $0x30] sm:$0xff]
  %v27 = vld [vmem:[%s0 + $0x38] sm:$0xff]
  %v28 = vld [vmem:[%s0 + $0x40] sm:$0xff]
  %v29 = vld [vmem:[%s0 + $0x48] sm:$0xff]
  %v30 = vld [vmem:[%s0 + $0x50] sm:$0xff]
  %v31 = vld [vmem:[%s0 + $0x58] sm:$0xff]
  %v32 = vld [vmem:[%s0 + $0x60] sm:$0xff]
  %v33 = vld [vmem:[%s0 + $0x68] sm:$0xff]
  %v34 = vld [vmem:[%s0 + $0x70] sm:$0xff]
  %v35 = vld [vmem:[%s0 + $0x78] sm:$0xff]
  %v36 = vld [vmem:[%s1] sm:$0xff]
  %v37 = vld [vmem:[%s1 + $0x8] sm:$0xff]
  %v38 = vld [vmem:[%s2] sm:$0x1]
  %v40 = vlaneseq
  %v41 = vshrl.u32 %v40, 7
  %v42 = vsub.s32 0, %v41
  %v43 = vrot.slane %v38, %v42
  %vm45 = vcmask 130048
  %v47 = vsel %vm45, %v20, 0
  %v50 = vsel %vm45, %v21, 0
  %v53 = vsel %vm45, %v22, 0
  %v56 = vsel %vm45, %v23, 0
  %v59 = vsel %vm45, %v24, 0
  %v62 = vsel %vm45, %v25, 0
  %v65 = vsel %vm45, %v26, 0
  %v68 = vsel %vm45, %v27, 0
  %v71 = vsel %vm45, %v28, 0
  %v74 = vsel %vm45, %v29, 0
  %v77 = vsel %vm45, %v30, 0
  %v80 = vsel %vm45, %v31, 0
  %v83 = vsel %vm45, %v32, 0
  %v86 = vsel %vm45, %v33, 0
  %v89 = vsel %vm45, %v34, 0
  %v92 = vsel %vm45, %v35, 0
  %94 = vmatprep.subr.mxu0 0.0
  %95 = vmatpush1.msra.mxu0 %v36
  %96 = vmatprep.subr.mxu0 0.0
  %97 = vmatpush1.msra.mxu0 %v37
  %98 = vmatprep.subr.mxu0 0.0
  %99 = vmatpush1.msra.mxu0 0.0
  %100 = vmatprep.subr.mxu0 0.0
  %101 = vmatpush1.msra.mxu0 0.0
  %102 = vmatprep.subr.mxu0 0.0
  %103 = vmatpush1.msra.mxu0 0.0
  %104 = vmatprep.subr.mxu0 0.0
  %105 = vmatpush1.msra.mxu0 0.0
  %106 = vmatprep.subr.mxu0 0.0
  %107 = vmatpush1.msra.mxu0 0.0
  %108 = vmatprep.subr.mxu0 0.0
  %109 = vmatpush1.msra.mxu0 0.0
  %110 = vmatprep.subr.mxu0 0.0
  %111 = vmatpush1.msra.mxu0 0.0
  %112 = vmatprep.subr.mxu0 0.0
  %113 = vmatpush1.msra.mxu0 0.0
  %114 = vmatprep.subr.mxu0 0.0
  %115 = vmatpush1.msra.mxu0 0.0
  %116 = vmatprep.subr.mxu0 0.0
  %117 = vmatpush1.msra.mxu0 0.0
  %118 = vmatprep.subr.mxu0 0.0
  %119 = vmatpush1.msra.mxu0 0.0
  %120 = vmatprep.subr.mxu0 0.0
  %121 = vmatpush1.msra.mxu0 0.0
  %122 = vmatprep.subr.mxu0 0.0
  %123 = vmatpush1.msra.mxu0 0.0
  %124 = vmatprep.subr.mxu0 0.0
  %125 = vmatpush1.msra.mxu0 0.0
  %126 = vmatprep.subr.mxu0 0.0
  %127 = vmatpush1.msra.mxu0 0.0
  %128 = vmatprep.subr.mxu0 0.0
  %129 = vmatpush1.msra.mxu0 0.0
  %130 = vmatprep.subr.mxu0 0.0
  %131 = vmatpush1.msra.mxu0 0.0
  %132 = vmatprep.subr.mxu0 0.0
  %133 = vmatpush1.msra.mxu0 0.0
  %134 = vmatprep.subr.mxu0 0.0
  %135 = vmatpush1.msra.mxu0 0.0
  %136 = vmatprep.subr.mxu0 0.0
  %137 = vmatpush1.msra.mxu0 0.0
  %138 = vmatprep.subr.mxu0 0.0
  %139 = vmatpush1.msra.mxu0 0.0
  %140 = vmatprep.subr.mxu0 0.0
  %141 = vmatpush1.msra.mxu0 0.0
  %142 = vmatprep.subr.mxu0 0.0
  %143 = vmatpush1.msra.mxu0 0.0
  %144 = vmatprep.subr.mxu0 0.0
  %145 = vmatpush1.msra.mxu0 0.0
  %146 = vmatprep.subr.mxu0 0.0
  %147 = vmatpush1.msra.mxu0 0.0
  %148 = vmatprep.subr.mxu0 0.0
  %149 = vmatpush1.msra.mxu0 0.0
  %150 = vmatprep.subr.mxu0 0.0
  %151 = vmatpush1.msra.mxu0 0.0
  %152 = vmatprep.subr.mxu0 0.0
  %153 = vmatpush1.msra.mxu0 0.0
  %154 = vmatprep.subr.mxu0 0.0
  %155 = vmatpush1.msra.mxu0 0.0
  %156 = vmatprep.subr.mxu0 0.0
  %157 = vmatpush1.msra.mxu0 0.0
  %158 = vmatprep.mubr.f32.mxu0 0.0
  %159 = vmatmul.mubr.f32.gmra.mrb[0].mxu0 %v47
  %v160 = vpop.f32.mrb[0].mxu0
  %v161 = vadd.f32 %v43, %v160
  %v162 = vpop.f32.mrb[0].mxu0
  %163 = vmatprep.mubr.f32.mxu0 0.0
  %164 = vmatmul.mubr.f32.gmra.mrb[0].mxu0 %v50
  %v165 = vpop.f32.mrb[0].mxu0
  %v166 = vadd.f32 %v43, %v165
  %v167 = vpop.f32.mrb[0].mxu0
  %168 = vmatprep.mubr.f32.mxu0 0.0
  %169 = vmatmul.mubr.f32.gmra.mrb[0].mxu0 %v53
  %v170 = vpop.f32.mrb[0].mxu0
  %v171 = vadd.f32 %v43, %v170
  %v172 = vpop.f32.mrb[0].mxu0
  %173 = vmatprep.mubr.f32.mxu0 0.0
  %174 = vmatmul.mubr.f32.gmra.mrb[0].mxu0 %v56
  %v175 = vpop.f32.mrb[0].mxu0
  %v176 = vadd.f32 %v43, %v175
  %v177 = vpop.f32.mrb[0].mxu0
  %178 = vmatprep.mubr.f32.mxu0 0.0
  %179 = vmatmul.mubr.f32.gmra.mrb[0].mxu0 %v59
  %v180 = vpop.f32.mrb[0].mxu0
  %v181 = vadd.f32 %v43, %v180
  %v182 = vpop.f32.mrb[0].mxu0
  %183 = vmatprep.mubr.f32.mxu0 0.0
  %184 = vmatmul.mubr.f32.gmra.mrb[0].mxu0 %v62
  %v185 = vpop.f32.mrb[0].mxu0
  %v186 = vadd.f32 %v43, %v185
  %v187 = vpop.f32.mrb[0].mxu0
  %188 = vmatprep.mubr.f32.mxu0 0.0
  %189 = vmatmul.mubr.f32.gmra.mrb[0].mxu0 %v65
  %v190 = vpop.f32.mrb[0].mxu0
  %v191 = vadd.f32 %v43, %v190
  %v192 = vpop.f32.mrb[0].mxu0
  %193 = vmatprep.mubr.f32.mxu0 0.0
  %194 = vmatmul.mubr.f32.gmra.mrb[0].mxu0 %v68
  %v195 = vpop.f32.mrb[0].mxu0
  %v196 = vadd.f32 %v43, %v195
  %v197 = vpop.f32.mrb[0].mxu0
  %198 = vmatprep.mubr.f32.mxu0 0.0
  %199 = vmatmul.mubr.f32.gmra.mrb[0].mxu0 %v71
  %v200 = vpop.f32.mrb[0].mxu0
  %v201 = vadd.f32 %v43, %v200
  %v202 = vpop.f32.mrb[0].mxu0
  %203 = vmatprep.mubr.f32.mxu0 0.0
  %204 = vmatmul.mubr.f32.gmra.mrb[0].mxu0 %v74
  %v205 = vpop.f32.mrb[0].mxu0
  %v206 = vadd.f32 %v43, %v205
  %v207 = vpop.f32.mrb[0].mxu0
  %208 = vmatprep.mubr.f32.mxu0 0.0
  %209 = vmatmul.mubr.f32.gmra.mrb[0].mxu0 %v77
  %v210 = vpop.f32.mrb[0].mxu0
  %v211 = vadd.f32 %v43, %v210
  %v212 = vpop.f32.mrb[0].mxu0
  %213 = vmatprep.mubr.f32.mxu0 0.0
  %214 = vmatmul.mubr.f32.gmra.mrb[0].mxu0 %v80
  %v215 = vpop.f32.mrb[0].mxu0
  %v216 = vadd.f32 %v43, %v215
  %v217 = vpop.f32.mrb[0].mxu0
  %218 = vmatprep.mubr.f32.mxu0 0.0
  %219 = vmatmul.mubr.f32.gmra.mrb[0].mxu0 %v83
  %v220 = vpop.f32.mrb[0].mxu0
  %v221 = vadd.f32 %v43, %v220
  %v222 = vpop.f32.mrb[0].mxu0
  %223 = vmatprep.mubr.f32.mxu0 0.0
  %224 = vmatmul.mubr.f32.gmra.mrb[0].mxu0 %v86
  %v225 = vpop.f32.mrb[0].mxu0
  %v226 = vadd.f32 %v43, %v225
  %v227 = vpop.f32.mrb[0].mxu0
  %228 = vmatprep.mubr.f32.mxu0 0.0
  %229 = vmatmul.mubr.f32.gmra.mrb[0].mxu0 %v89
  %v230 = vpop.f32.mrb[0].mxu0
  %v231 = vadd.f32 %v43, %v230
  %v232 = vpop.f32.mrb[0].mxu0
  %233 = vmatprep.mubr.f32.mxu0 0.0
  %234 = vmatmul.mubr.f32.gmra.mrb[0].mxu0 %v92
  %v235 = vpop.f32.mrb[0].mxu0
  %v236 = vadd.f32 %v43, %v235
  %v237 = vpop.f32.mrb[0].mxu0
  %238 = vdwg.mxu0
  %v239 = vmul.f32 %v161, 0.5
  %v240 = vmul.f32 %v166, 0.5
  %v241 = vmul.f32 %v171, 0.5
  %v242 = vmul.f32 %v176, 0.5
  %v243 = vmul.f32 %v181, 0.5
  %v244 = vmul.f32 %v186, 0.5
  %v245 = vmul.f32 %v191, 0.5
  %v246 = vmul.f32 %v196, 0.5
  %v247 = vmul.f32 %v201, 0.5
  %v248 = vmul.f32 %v206, 0.5
  %v249 = vmul.f32 %v211, 0.5
  %v250 = vmul.f32 %v216, 0.5
  %v251 = vmul.f32 %v221, 0.5
  %v252 = vmul.f32 %v226, 0.5
  %v253 = vmul.f32 %v231, 0.5
  %v254 = vmul.f32 %v236, 0.5
  %v255 = vmul.f32 %v161, 0.044715
  %v256 = vmul.f32 %v166, 0.044715
  %v257 = vmul.f32 %v171, 0.044715
  %v258 = vmul.f32 %v176, 0.044715
  %v259 = vmul.f32 %v181, 0.044715
  %v260 = vmul.f32 %v186, 0.044715
  %v261 = vmul.f32 %v191, 0.044715
  %v262 = vmul.f32 %v196, 0.044715
  %v263 = vmul.f32 %v201, 0.044715
  %v264 = vmul.f32 %v206, 0.044715
  %v265 = vmul.f32 %v211, 0.044715
  %v266 = vmul.f32 %v216, 0.044715
  %v267 = vmul.f32 %v221, 0.044715
  %v268 = vmul.f32 %v226, 0.044715
  %v269 = vmul.f32 %v231, 0.044715
  %v270 = vmul.f32 %v236, 0.044715
  %v271 = vmul.f32 %v255, %v161
  %v272 = vmul.f32 %v256, %v166
  %v273 = vmul.f32 %v257, %v171
  %v274 = vmul.f32 %v258, %v176
  %v275 = vmul.f32 %v259, %v181
  %v276 = vmul.f32 %v260, %v186
  %v277 = vmul.f32 %v261, %v191
  %v278 = vmul.f32 %v262, %v196
  %v279 = vmul.f32 %v263, %v201
  %v280 = vmul.f32 %v264, %v206
  %v281 = vmul.f32 %v265, %v211
  %v282 = vmul.f32 %v266, %v216
  %v283 = vmul.f32 %v267, %v221
  %v284 = vmul.f32 %v268, %v226
  %v285 = vmul.f32 %v269, %v231
  %v286 = vmul.f32 %v270, %v236
  %v287 = vmul.f32 %v271, %v161
  %v288 = vmul.f32 %v272, %v166
  %v289 = vmul.f32 %v273, %v171
  %v290 = vmul.f32 %v274, %v176
  %v291 = vmul.f32 %v275, %v181
  %v292 = vmul.f32 %v276, %v186
  %v293 = vmul.f32 %v277, %v191
  %v294 = vmul.f32 %v278, %v196
  %v295 = vmul.f32 %v279, %v201
  %v296 = vmul.f32 %v280, %v206
  %v297 = vmul.f32 %v281, %v211
  %v298 = vmul.f32 %v282, %v216
  %v299 = vmul.f32 %v283, %v221
  %v300 = vmul.f32 %v284, %v226
  %v301 = vmul.f32 %v285, %v231
  %v302 = vmul.f32 %v286, %v236
  %v303 = vadd.f32 %v161, %v287
  %v304 = vadd.f32 %v166, %v288
  %v305 = vadd.f32 %v171, %v289
  %v306 = vadd.f32 %v176, %v290
  %v307 = vadd.f32 %v181, %v291
  %v308 = vadd.f32 %v186, %v292
  %v309 = vadd.f32 %v191, %v293
  %v310 = vadd.f32 %v196, %v294
  %v311 = vadd.f32 %v201, %v295
  %v312 = vadd.f32 %v206, %v296
  %v313 = vadd.f32 %v211, %v297
  %v314 = vadd.f32 %v216, %v298
  %v315 = vadd.f32 %v221, %v299
  %v316 = vadd.f32 %v226, %v300
  %v317 = vadd.f32 %v231, %v301
  %v318 = vadd.f32 %v236, %v302
  %v319 = vmul.f32 %v303, 0.7978846
  %v320 = vmul.f32 %v304, 0.7978846
  %v321 = vmul.f32 %v305, 0.7978846
  %v322 = vmul.f32 %v306, 0.7978846
  %v323 = vmul.f32 %v307, 0.7978846
  %v324 = vmul.f32 %v308, 0.7978846
  %v325 = vmul.f32 %v309, 0.7978846
  %v326 = vmul.f32 %v310, 0.7978846
  %v327 = vmul.f32 %v311, 0.7978846
  %v328 = vmul.f32 %v312, 0.7978846
  %v329 = vmul.f32 %v313, 0.7978846
  %v330 = vmul.f32 %v314, 0.7978846
  %v331 = vmul.f32 %v315, 0.7978846
  %v332 = vmul.f32 %v316, 0.7978846
  %v333 = vmul.f32 %v317, 0.7978846
  %v334 = vmul.f32 %v318, 0.7978846
  %v335 = vtanh.pop %v319
  %v336 = vtanh.pop %v320
  %v337 = vtanh.pop %v321
  %v338 = vtanh.pop %v322
  %v339 = vtanh.pop %v323
  %v340 = vtanh.pop %v324
  %v341 = vtanh.pop %v325
  %v342 = vtanh.pop %v326
  %v343 = vtanh.pop %v327
  %v344 = vtanh.pop %v328
  %v345 = vtanh.pop %v329
  %v346 = vtanh.pop %v330
  %v347 = vtanh.pop %v331
  %v348 = vtanh.pop %v332
  %v349 = vtanh.pop %v333
  %v350 = vtanh.pop %v334
  %v351 = vadd.f32 %v335, 1.0
  %v352 = vadd.f32 %v336, 1.0
  %v353 = vadd.f32 %v337, 1.0
  %v354 = vadd.f32 %v338, 1.0
  %v355 = vadd.f32 %v339, 1.0
  %v356 = vadd.f32 %v340, 1.0
  %v357 = vadd.f32 %v341, 1.0
  %v358 = vadd.f32 %v342, 1.0
  %v359 = vadd.f32 %v343, 1.0
  %v360 = vadd.f32 %v344, 1.0
  %v361 = vadd.f32 %v345, 1.0
  %v362 = vadd.f32 %v346, 1.0
  %v363 = vadd.f32 %v347, 1.0
  %v364 = vadd.f32 %v348, 1.0
  %v365 = vadd.f32 %v349, 1.0
  %v366 = vadd.f32 %v350, 1.0
  %v367 = vmul.f32 %v239, %v351
  %v368 = vmul.f32 %v240, %v352
  %v369 = vmul.f32 %v241, %v353
  %v370 = vmul.f32 %v242, %v354
  %v371 = vmul.f32 %v243, %v355
  %v372 = vmul.f32 %v244, %v356
  %v373 = vmul.f32 %v245, %v357
  %v374 = vmul.f32 %v246, %v358
  %v375 = vmul.f32 %v247, %v359
  %v376 = vmul.f32 %v248, %v360
  %v377 = vmul.f32 %v249, %v361
  %v378 = vmul.f32 %v250, %v362
  %v379 = vmul.f32 %v251, %v363
  %v380 = vmul.f32 %v252, %v364
  %v381 = vmul.f32 %v253, %v365
  %v382 = vmul.f32 %v254, %v366
  %v383 = vld [vmem:[%s3] sm:$0xff]
  %v384 = vld [vmem:[%s3 + $0x8] sm:$0xff]
  %v385 = vld [vmem:[%s3 + $0x10] sm:$0xff]
  %v386 = vld [vmem:[%s3 + $0x18] sm:$0xff]
  %v387 = vld [vmem:[%s4] sm:$0x1]
  %v389 = vlaneseq
  %v390 = vshrl.u32 %v389, 7
  %v391 = vsub.s32 0, %v390
  %v392 = vrot.slane %v387, %v391
  %vm394 = vcmask 261120
  %v396 = vsel %vm394, %v367, 0
  %v399 = vsel %vm394, %v368, 0
  %v402 = vsel %vm394, %v369, 0
  %v405 = vsel %vm394, %v370, 0
  %v408 = vsel %vm394, %v371, 0
  %v411 = vsel %vm394, %v372, 0
  %v414 = vsel %vm394, %v373, 0
  %v417 = vsel %vm394, %v374, 0
  %v420 = vsel %vm394, %v375, 0
  %v423 = vsel %vm394, %v376, 0
  %v426 = vsel %vm394, %v377, 0
  %v429 = vsel %vm394, %v378, 0
  %v432 = vsel %vm394, %v379, 0
  %v435 = vsel %vm394, %v380, 0
  %v438 = vsel %vm394, %v381, 0
  %v441 = vsel %vm394, %v382, 0
  %443 = vmatprep.subr.mxu0 0.0
  %444 = vmatpush1.msra.mxu0 %v383
  %445 = vmatprep.subr.mxu0 0.0
  %446 = vmatpush1.msra.mxu0 %v384
  %447 = vmatprep.subr.mxu0 0.0
  %448 = vmatpush1.msra.mxu0 %v385
  %449 = vmatprep.subr.mxu0 0.0
  %450 = vmatpush1.msra.mxu0 %v386
  %451 = vmatprep.subr.mxu0 0.0
  %452 = vmatpush1.msra.mxu0 0.0
  %453 = vmatprep.subr.mxu0 0.0
  %454 = vmatpush1.msra.mxu0 0.0
  %455 = vmatprep.subr.mxu0 0.0
  %456 = vmatpush1.msra.mxu0 0.0
  %457 = vmatprep.subr.mxu0 0.0
  %458 = vmatpush1.msra.mxu0 0.0
  %459 = vmatprep.subr.mxu0 0.0
  %460 = vmatpush1.msra.mxu0 0.0
  %461 = vmatprep.subr.mxu0 0.0
  %462 = vmatpush1.msra.mxu0 0.0
  %463 = vmatprep.subr.mxu0 0.0
  %464 = vmatpush1.msra.mxu0 0.0
  %465 = vmatprep.subr.mxu0 0.0
  %466 = vmatpush1.msra.mxu0 0.0
  %467 = vmatprep.subr.mxu0 0.0
  %468 = vmatpush1.msra.mxu0 0.0
  %469 = vmatprep.subr.mxu0 0.0
  %470 = vmatpush1.msra.mxu0 0.0
  %471 = vmatprep.subr.mxu0 0.0
  %472 = vmatpush1.msra.mxu0 0.0
  %473 = vmatprep.subr.mxu0 0.0
  %474 = vmatpush1.msra.mxu0 0.0
  %475 = vmatprep.subr.mxu0 0.0
  %476 = vmatpush1.msra.mxu0 0.0
  %477 = vmatprep.subr.mxu0 0.0
  %478 = vmatpush1.msra.mxu0 0.0
  %479 = vmatprep.subr.mxu0 0.0
  %480 = vmatpush1.msra.mxu0 0.0
  %481 = vmatprep.subr.mxu0 0.0
  %482 = vmatpush1.msra.mxu0 0.0
  %483 = vmatprep.subr.mxu0 0.0
  %484 = vmatpush1.msra.mxu0 0.0
  %485 = vmatprep.subr.mxu0 0.0
  %486 = vmatpush1.msra.mxu0 0.0
  %487 = vmatprep.subr.mxu0 0.0
  %488 = vmatpush1.msra.mxu0 0.0
  %489 = vmatprep.subr.mxu0 0.0
  %490 = vmatpush1.msra.mxu0 0.0
  %491 = vmatprep.subr.mxu0 0.0
  %492 = vmatpush1.msra.mxu0 0.0
  %493 = vmatprep.subr.mxu0 0.0
  %494 = vmatpush1.msra.mxu0 0.0
  %495 = vmatprep.subr.mxu0 0.0
  %496 = vmatpush1.msra.mxu0 0.0
  %497 = vmatprep.subr.mxu0 0.0
  %498 = vmatpush1.msra.mxu0 0.0
  %499 = vmatprep.subr.mxu0 0.0
  %500 = vmatpush1.msra.mxu0 0.0
  %501 = vmatprep.subr.mxu0 0.0
  %502 = vmatpush1.msra.mxu0 0.0
  %503 = vmatprep.subr.mxu0 0.0
  %504 = vmatpush1.msra.mxu0 0.0
  %505 = vmatprep.subr.mxu0 0.0
  %506 = vmatpush1.msra.mxu0 0.0
  %507 = vmatprep.mubr.f32.mxu0 0.0
  %508 = vmatmul.mubr.f32.gmra.mrb[0].mxu0 %v396
  %v509 = vpop.f32.mrb[0].mxu0
  %v510 = vadd.f32 %v392, %v509
  %v511 = vpop.f32.mrb[0].mxu0
  %512 = vmatprep.mubr.f32.mxu0 0.0
  %513 = vmatmul.mubr.f32.gmra.mrb[0].mxu0 %v399
  %v514 = vpop.f32.mrb[0].mxu0
  %v515 = vadd.f32 %v392, %v514
  %v516 = vpop.f32.mrb[0].mxu0
  %517 = vmatprep.mubr.f32.mxu0 0.0
  %518 = vmatmul.mubr.f32.gmra.mrb[0].mxu0 %v402
  %v519 = vpop.f32.mrb[0].mxu0
  %v520 = vadd.f32 %v392, %v519
  %v521 = vpop.f32.mrb[0].mxu0
  %522 = vmatprep.mubr.f32.mxu0 0.0
  %523 = vmatmul.mubr.f32.gmra.mrb[0].mxu0 %v405
  %v524 = vpop.f32.mrb[0].mxu0
  %v525 = vadd.f32 %v392, %v524
  %v526 = vpop.f32.mrb[0].mxu0
  %527 = vmatprep.mubr.f32.mxu0 0.0
  %528 = vmatmul.mubr.f32.gmra.mrb[0].mxu0 %v408
  %v529 = vpop.f32.mrb[0].mxu0
  %v530 = vadd.f32 %v392, %v529
  %v531 = vpop.f32.mrb[0].mxu0
  %532 = vmatprep.mubr.f32.mxu0 0.0
  %533 = vmatmul.mubr.f32.gmra.mrb[0].mxu0 %v411
  %v534 = vpop.f32.mrb[0].mxu0
  %v535 = vadd.f32 %v392, %v534
  %v536 = vpop.f32.mrb[0].mxu0
  %537 = vmatprep.mubr.f32.mxu0 0.0
  %538 = vmatmul.mubr.f32.gmra.mrb[0].mxu0 %v414
  %v539 = vpop.f32.mrb[0].mxu0
  %v540 = vadd.f32 %v392, %v539
  %v541 = vpop.f32.mrb[0].mxu0
  %542 = vmatprep.mubr.f32.mxu0 0.0
  %543 = vmatmul.mubr.f32.gmra.mrb[0].mxu0 %v417
  %v544 = vpop.f32.mrb[0].mxu0
  %v545 = vadd.f32 %v392, %v544
  %v546 = vpop.f32.mrb[0].mxu0
  %547 = vmatprep.mubr.f32.mxu0 0.0
  %548 = vmatmul.mubr.f32.gmra.mrb[0].mxu0 %v420
  %v549 = vpop.f32.mrb[0].mxu0
  %v550 = vadd.f32 %v392, %v549
  %v551 = vpop.f32.mrb[0].mxu0
  %552 = vmatprep.mubr.f32.mxu0 0.0
  %553 = vmatmul.mubr.f32.gmra.mrb[0].mxu0 %v423
  %v554 = vpop.f32.mrb[0].mxu0
  %v555 = vadd.f32 %v392, %v554
  %v556 = vpop.f32.mrb[0].mxu0
  %557 = vmatprep.mubr.f32.mxu0 0.0
  %558 = vmatmul.mubr.f32.gmra.mrb[0].mxu0 %v426
  %v559 = vpop.f32.mrb[0].mxu0
  %v560 = vadd.f32 %v392, %v559
  %v561 = vpop.f32.mrb[0].mxu0
  %562 = vmatprep.mubr.f32.mxu0 0.0
  %563 = vmatmul.mubr.f32.gmra.mrb[0].mxu0 %v429
  %v564 = vpop.f32.mrb[0].mxu0
  %v565 = vadd.f32 %v392, %v564
  %v566 = vpop.f32.mrb[0].mxu0
  %567 = vmatprep.mubr.f32.mxu0 0.0
  %568 = vmatmul.mubr.f32.gmra.mrb[0].mxu0 %v432
  %v569 = vpop.f32.mrb[0].mxu0
  %v570 = vadd.f32 %v392, %v569
  %v571 = vpop.f32.mrb[0].mxu0
  %572 = vmatprep.mubr.f32.mxu0 0.0
  %573 = vmatmul.mubr.f32.gmra.mrb[0].mxu0 %v435
  %v574 = vpop.f32.mrb[0].mxu0
  %v575 = vadd.f32 %v392, %v574
  %v576 = vpop.f32.mrb[0].mxu0
  %577 = vmatprep.mubr.f32.mxu0 0.0
  %578 = vmatmul.mubr.f32.gmra.mrb[0].mxu0 %v438
  %v579 = vpop.f32.mrb[0].mxu0
  %v580 = vadd.f32 %v392, %v579
  %v581 = vpop.f32.mrb[0].mxu0
  %582 = vmatprep.mubr.f32.mxu0 0.0
  %583 = vmatmul.mubr.f32.gmra.mrb[0].mxu0 %v441
  %v584 = vpop.f32.mrb[0].mxu0
  %v585 = vadd.f32 %v392, %v584
  %v586 = vpop.f32.mrb[0].mxu0
  %587 = vdwg.mxu0
  %588 = vst.msk [vmem:[%s5] sm:$0xff] %vm45, %v510
  %589 = vst.msk [vmem:[%s5 + $0x8] sm:$0xff] %vm45, %v515
  %590 = vst.msk [vmem:[%s5 + $0x10] sm:$0xff] %vm45, %v520
  %591 = vst.msk [vmem:[%s5 + $0x18] sm:$0xff] %vm45, %v525
  %592 = vst.msk [vmem:[%s5 + $0x20] sm:$0xff] %vm45, %v530
  %593 = vst.msk [vmem:[%s5 + $0x28] sm:$0xff] %vm45, %v535
  %594 = vst.msk [vmem:[%s5 + $0x30] sm:$0xff] %vm45, %v540
  %595 = vst.msk [vmem:[%s5 + $0x38] sm:$0xff] %vm45, %v545
  %596 = vst.msk [vmem:[%s5 + $0x40] sm:$0xff] %vm45, %v550
  %597 = vst.msk [vmem:[%s5 + $0x48] sm:$0xff] %vm45, %v555
  %598 = vst.msk [vmem:[%s5 + $0x50] sm:$0xff] %vm45, %v560
  %599 = vst.msk [vmem:[%s5 + $0x58] sm:$0xff] %vm45, %v565
  %600 = vst.msk [vmem:[%s5 + $0x60] sm:$0xff] %vm45, %v570
  %601 = vst.msk [vmem:[%s5 + $0x68] sm:$0xff] %vm45, %v575
  %602 = vst.msk [vmem:[%s5 + $0x70] sm:$0xff] %vm45, %v580
  %603 = vst.msk [vmem:[%s5 + $0x78] sm:$0xff] %vm45, %v585
  // Predicated region
  $region22: #{tpu_custom_call.1} parent=0 // pred_check
    _
  $region23: #{tpu_custom_call.1} parent=0 // pred_check_branch
    %605 = sbr.rel (0) target = $region25
  $region24: #{tpu_custom_call.1} parent=0 // pred_region
    _
  $region25: #{tpu_custom_call.1} parent=0 // pred_fallthru
    _
  // Predicated region
  $region26: #{tpu_custom_call.1} parent=0 // pred_check
    _
  $region27: #{tpu_custom_call.1} parent=0 // pred_check_branch
    %607 = sbr.rel (0) target = $region29
  $region28: #{tpu_custom_call.1} parent=0 // pred_region
    _
  $region29: #{tpu_custom_call.1} parent=0 // pred_fallthru
    _

</llo_original>
